<compile_context>
chip_gen: v7x
topology: tpu7x:2x2x1
jax: 0.10.0
libtpu: 0.0.40
codegen_flags: <defaults>
</compile_context>

<pallas_src>
import functools

import jax
import jax.numpy as jnp
from jax import lax
from jax.experimental import pallas as pl
from jax.experimental.pallas import tpu as pltpu


def _round_up(x, m):
    return ((x + m - 1) // m) * m


def _unet_linear_kernel(alpha_ref, x_ref, w_ref, wlt_ref, bcol_ref, brow_ref,
                        o_ref, *, repeats, chunk_m):
    """One grid step: push a (tile_m, C) row-major activation tile through all
    `repeats` Linear+PReLU layers, chunk_m rows at a time.

    alpha_ref : SMEM (R,)       PReLU slope per layer (num_parameters=1)
    x_ref     : VMEM (tm, C)    row-major activation tile (f32)
    w_ref     : VMEM (R, C, C)  Linear weights, torch (out, in) layout (bf16)
    wlt_ref   : VMEM (C, C)     last layer's weight pre-transposed to (in, out)
    bcol_ref  : VMEM (R, C, 1)  biases, channel-major broadcast shape (f32)
    brow_ref  : VMEM (R, 1, C)  biases, row-major broadcast shape (f32)
    o_ref     : VMEM (tm, C)    row-major output tile (f32)
    """
    n_chunks = x_ref.shape[0] // chunk_m

    def prelu(y, r):
        a = alpha_ref[r]                       # scalar slope from SMEM
        return jnp.where(y > 0.0, y, a * y)    # PReLU in f32

    @pl.loop(0, n_chunks)
    def _chunk(j):
        start = pl.multiple_of(j * chunk_m, chunk_m)
        # (cm, C) row-major chunk; cast once to bf16 for the MXU.
        xs = x_ref[pl.ds(start, chunk_m), :].astype(jnp.bfloat16)

        if repeats == 1:
            # Single layer: plain NN matmul against the pre-transposed weight,
            # row-major in -> row-major out.
            y = jnp.dot(xs, wlt_ref[...], preferred_element_type=jnp.float32)
            out = prelu(y + brow_ref[0], 0)                       # (cm, C)
        else:
            # Layer 0 (NT): contract x's channel axis against W's in-axis so
            # the MXU emits the channel-major (C, cm) tile directly — this
            # absorbs the row->channel relayout (no host-side transpose pass).
            y = lax.dot_general(w_ref[0], xs, (((1,), (1,)), ((), ())),
                                preferred_element_type=jnp.float32)  # (C, cm)
            h = prelu(y + bcol_ref[0], 0)
            # Middle layers (NN): lane-dense channel-major matmuls, N = cm.
            for r in range(1, repeats - 1):
                y = jnp.dot(w_ref[r], h.astype(jnp.bfloat16),
                            preferred_element_type=jnp.float32)      # (C, cm)
                h = prelu(y + bcol_ref[r], r)
            # Last layer (TN, against the host-pre-transposed (in, out)
            # weight): the MXU emits the row-major (cm, C) block directly, so
            # the wrapper needs no output transpose either.
            r = repeats - 1
            y = lax.dot_general(h.astype(jnp.bfloat16), wlt_ref[...],
                                (((0,), (0,)), ((), ())),
                                preferred_element_type=jnp.float32)   # (cm, C)
            out = prelu(y + brow_ref[r], r)

        o_ref[pl.ds(start, chunk_m), :] = out.astype(o_ref.dtype)


def unet_linear_pallas(x, w, b, alpha, *, tile_m=4096, chunk_m=256,
                       target_steps=8):
    """Apply the UNetLinear body over the last axis of x.

    x     : (..., C) float32
    w     : (R, C, C) Linear weights in torch (out_features, in_features) layout
    b     : (R, C)    Linear biases
    alpha : (R,)      PReLU slopes (one scalar per layer)
    """
    orig_shape = x.shape
    C = orig_shape[-1]
    R = w.shape[0]

    x2d = x.reshape(-1, C).astype(jnp.float32)
    M = x2d.shape[0]

    # Compute chunk: multiple of 128 (lane width) — it is the N dimension of
    # the channel-major matmuls.
    cm = max(128, _round_up(int(chunk_m), 128))
    # Tile granule: keep tiles a multiple of 512 rows when possible (feeds all
    # four of v5e's 128-wide MXUs) and always a multiple of the compute chunk.
    granule = 512 if 512 % cm == 0 else cm
    # Row tile: sized from a target step count (amortizes ~0.35 us/step while
    # keeping several steps for v7x's 2 TCs and pipeline depth), capped by
    # tile_m so the double-buffered tiles stay a few MiB.
    tm = _round_up(pl.cdiv(M, target_steps), granule)
    tm = max(granule, min(tm, _round_up(int(tile_m), granule)))
    assert tm % cm == 0
    m_pad = _round_up(M, tm)
    if m_pad != M:
        # Rows are independent; zero-padded rows just compute PReLU(bias) and
        # are sliced off below.
        x2d = jnp.pad(x2d, ((0, m_pad - M), (0, 0)))

    # MXU operands in bf16 (native on v5e/v6e/v7x, ~3x fewer pushes than
    # emulated f32xf32); bias/PReLU/accumulation stay f32.
    w_bf = w.astype(jnp.bfloat16)                     # (R, C, C) torch (out,in)
    w_last_t = w_bf[R - 1].T                          # (C_in, C_out) for TN dot
    b_col = b.reshape(R, C, 1).astype(jnp.float32)
    b_row = b.reshape(R, 1, C).astype(jnp.float32)
    alpha = alpha.reshape(R).astype(jnp.float32)

    # VMEM budget: double-buffered in/out tiles (lane dim conservatively padded
    # to 128) + tiny resident weights/biases + headroom; capped at 32 MiB so it
    # is safe even on v7x (64 MiB physical / 32 MiB scoped default).
    c_lane = _round_up(C, 128)
    io_bytes = 2 * 2 * tm * c_lane * 4
    resident = R * C * C * 2 + C * C * 2 + 2 * R * C * 4
    vmem_limit = int(min(max(io_bytes + 4 * resident + (4 << 20), 16 << 20),
                         32 << 20))

    kernel = functools.partial(_unet_linear_kernel, repeats=R, chunk_m=cm)

    out2d = pl.pallas_call(
        kernel,
        out_shape=jax.ShapeDtypeStruct((m_pad, C), jnp.float32),
        grid=(m_pad // tm,),
        in_specs=[
            # PReLU slopes: whole array in SMEM, scalar-indexed in the kernel.
            pl.BlockSpec(memory_space=pltpu.MemorySpace.SMEM),
            # Row-major activation tile (contiguous HBM slab, no transpose).
            pl.BlockSpec((tm, C), lambda i: (i, 0)),
            # Resident (constant-block) weight / bias stacks — only KiB each.
            pl.BlockSpec((R, C, C), lambda i: (0, 0, 0)),
            pl.BlockSpec((C, C), lambda i: (0, 0)),
            pl.BlockSpec((R, C, 1), lambda i: (0, 0, 0)),
            pl.BlockSpec((R, 1, C), lambda i: (0, 0, 0)),
        ],
        out_specs=pl.BlockSpec((tm, C), lambda i: (i, 0)),
        compiler_params=pltpu.CompilerParams(
            dimension_semantics=("parallel",),
            vmem_limit_bytes=vmem_limit,
        ),
    )(alpha, x2d, w_bf, w_last_t, b_col, b_row)

    return out2d[:M].reshape(orig_shape)


def unet_linear_ref(x2d, w, b, alpha):
    """Pure-JAX f32 reference matching the PyTorch forward (row-major)."""
    h = x2d
    for r in range(w.shape[0]):
        y = h @ w[r].T + b[r]
        h = jnp.where(y > 0, y, alpha[r] * y)
    return h


if __name__ == "__main__":
    # Module config (channels_in == channels_out so the Sequential composes
    # for repeats > 1).
    repeats = 3
    channels = 32
    batch, seq = 2, 8   # x: (batch, seq, channels); Linear acts on last axis

    key = jax.random.PRNGKey(0)
    kx, kw, kb, kx2 = jax.random.split(key, 4)

    # Deterministic params mimicking nn.Linear's U(-1/sqrt(fan_in)) init.
    bound = 1.0 / (channels ** 0.5)
    # torch stores Linear weight as (out_features, in_features); keep that.
    w = jax.random.uniform(
        kw, (repeats, channels, channels), jnp.float32, -bound, bound
    )
    b = jax.random.uniform(kb, (repeats, channels), jnp.float32, -bound, bound)
    # nn.PReLU() default: single learnable slope initialized to 0.25.
    alpha = jnp.full((repeats,), 0.25, dtype=jnp.float32)

    # Small shape matching the module's forward.
    x = jax.random.normal(kx, (batch, seq, channels), dtype=jnp.float32)
    out = jax.block_until_ready(unet_linear_pallas(x, w, b, alpha))
    ref = unet_linear_ref(x.reshape(-1, channels), w, b, alpha).reshape(x.shape)
    assert out.shape == x.shape
    # bf16 MXU operands -> looser tolerance vs. the f32 reference.
    assert jnp.allclose(out, ref, atol=5e-2, rtol=5e-2), "mismatch (small)"

    # Second shape exercising row padding and a multi-step grid.
    x2 = jax.random.normal(kx2, (6, 400, channels), dtype=jnp.float32)
    out2 = jax.block_until_ready(unet_linear_pallas(x2, w, b, alpha))
    ref2 = unet_linear_ref(
        x2.reshape(-1, channels), w, b, alpha).reshape(x2.shape)
    assert jnp.allclose(out2, ref2, atol=5e-2, rtol=5e-2), "mismatch (padded)"

    print("KERNEL_OK")
</pallas_src>

<mosaic_0001>
module attributes {stable_mosaic.version = 11 : i64} {
  func.func @_unet_linear_kernel(%arg0: i32, %arg1: memref<3xf32, #tpu.memory_space<smem>>, %arg2: memref<512x32xf32, #tpu.memory_space<vmem>>, %arg3: memref<3x32x32xbf16, #tpu.memory_space<vmem>>, %arg4: memref<32x32xbf16, #tpu.memory_space<vmem>>, %arg5: memref<3x32x1xf32, #tpu.memory_space<vmem>>, %arg6: memref<3x1x32xf32, #tpu.memory_space<vmem>>, %arg7: memref<512x32xf32, #tpu.memory_space<vmem>>) attributes {dimension_semantics = [#tpu.dimension_semantics<parallel>], iteration_bounds = array<i64: 1>, scalar_prefetch = 0 : i64, scratch_operands = 0 : i64, tpu.core_type = #tpu.core_type<tc>, window_params = [{transform_indices = @transform_0, window_bounds = array<i64: 3>}, {transform_indices = @transform_1, window_bounds = array<i64: 512, 32>}, {pipeline_mode = #tpu.pipeline_mode<synchronous>, transform_indices = @transform_2, window_bounds = array<i64: 3, 32, 32>}, {pipeline_mode = #tpu.pipeline_mode<synchronous>, transform_indices = @transform_3, window_bounds = array<i64: 32, 32>}, {pipeline_mode = #tpu.pipeline_mode<synchronous>, transform_indices = @transform_4, window_bounds = array<i64: 3, 32, 1>}, {pipeline_mode = #tpu.pipeline_mode<synchronous>, transform_indices = @transform_5, window_bounds = array<i64: 3, 1, 32>}, {transform_indices = @transform_6, window_bounds = array<i64: 512, 32>}]} {
    %c0_i32 = arith.constant 0 : i32
    %c2_i32 = arith.constant 2 : i32
    %0 = arith.addi %c0_i32, %c2_i32 : i32
    %c1_i32 = arith.constant 1 : i32
    scf.for %arg8 = %c0_i32 to %0 step %c1_i32  : i32 {
      %c1_i32_1 = arith.constant 1 : i32
      %1 = arith.muli %arg8, %c1_i32_1 : i32
      %c0_i32_2 = arith.constant 0 : i32
      %2 = arith.addi %c0_i32_2, %1 : i32
      %c256_i32 = arith.constant 256 : i32
      %3 = arith.muli %2, %c256_i32 : i32
      %4 = tpu.assume_multiple %3, 256 : i32
      %5 = arith.index_cast %4 : i32 to index
      %c0 = arith.constant 0 : index
      %6 = vector.load %arg2[%5, %c0] : memref<512x32xf32, #tpu.memory_space<vmem>>, vector<256x32xf32>
      %7 = arith.truncf %6 : vector<256x32xf32> to vector<256x32xbf16>
      %c0_3 = arith.constant 0 : index
      %c0_4 = arith.constant 0 : index
      %c0_5 = arith.constant 0 : index
      %8 = vector.load %arg3[%c0_3, %c0_4, %c0_5] : memref<3x32x32xbf16, #tpu.memory_space<vmem>>, vector<1x32x32xbf16>
      %9 = vector.shape_cast %8 : vector<1x32x32xbf16> to vector<32x32xbf16>
      %cst = arith.constant dense<0.000000e+00> : vector<32x256xf32>
      %10 = tpu.matmul %9, %7, %cst {dimension_numbers = #tpu.dot_dimension_numbers<[1], [1], [0], [0], [0, 0, 1, 0], [], []>} : vector<32x32xbf16>, vector<256x32xbf16>, vector<32x256xf32> -> vector<32x256xf32>
      %c0_6 = arith.constant 0 : index
      %c0_7 = arith.constant 0 : index
      %c0_8 = arith.constant 0 : index
      %11 = vector.load %arg5[%c0_6, %c0_7, %c0_8] : memref<3x32x1xf32, #tpu.memory_space<vmem>>, vector<1x32x1xf32>
      %12 = vector.shape_cast %11 : vector<1x32x1xf32> to vector<32x1xf32>
      %13 = vector.broadcast %12 : vector<32x1xf32> to vector<32x256xf32>
      %14 = arith.addf %10, %13 : vector<32x256xf32>
      %c0_9 = arith.constant 0 : index
      %15 = memref.load %arg1[%c0_9] : memref<3xf32, #tpu.memory_space<smem>>
      %cst_10 = arith.constant 0.000000e+00 : f32
      %16 = vector.broadcast %cst_10 : f32 to vector<32x256xf32>
      %17 = arith.cmpf ogt, %14, %16 : vector<32x256xf32>
      %18 = vector.broadcast %15 : f32 to vector<32x256xf32>
      %19 = arith.mulf %18, %14 : vector<32x256xf32>
      %20 = arith.select %17, %14, %19 : vector<32x256xi1>, vector<32x256xf32>
      %c1 = arith.constant 1 : index
      %c0_11 = arith.constant 0 : index
      %c0_12 = arith.constant 0 : index
      %21 = vector.load %arg3[%c1, %c0_11, %c0_12] : memref<3x32x32xbf16, #tpu.memory_space<vmem>>, vector<1x32x32xbf16>
      %22 = vector.shape_cast %21 : vector<1x32x32xbf16> to vector<32x32xbf16>
      %23 = arith.truncf %20 : vector<32x256xf32> to vector<32x256xbf16>
      %cst_13 = arith.constant dense<0.000000e+00> : vector<32x256xf32>
      %24 = tpu.matmul %22, %23, %cst_13 {dimension_numbers = #tpu.dot_dimension_numbers<[1], [0], [0], [1], [0, 0, 1, 1], [], []>} : vector<32x32xbf16>, vector<32x256xbf16>, vector<32x256xf32> -> vector<32x256xf32>
      %c1_14 = arith.constant 1 : index
      %c0_15 = arith.constant 0 : index
      %c0_16 = arith.constant 0 : index
      %25 = vector.load %arg5[%c1_14, %c0_15, %c0_16] : memref<3x32x1xf32, #tpu.memory_space<vmem>>, vector<1x32x1xf32>
      %26 = vector.shape_cast %25 : vector<1x32x1xf32> to vector<32x1xf32>
      %27 = vector.broadcast %26 : vector<32x1xf32> to vector<32x256xf32>
      %28 = arith.addf %24, %27 : vector<32x256xf32>
      %c1_17 = arith.constant 1 : index
      %29 = memref.load %arg1[%c1_17] : memref<3xf32, #tpu.memory_space<smem>>
      %cst_18 = arith.constant 0.000000e+00 : f32
      %30 = vector.broadcast %cst_18 : f32 to vector<32x256xf32>
      %31 = arith.cmpf ogt, %28, %30 : vector<32x256xf32>
      %32 = vector.broadcast %29 : f32 to vector<32x256xf32>
      %33 = arith.mulf %32, %28 : vector<32x256xf32>
      %34 = arith.select %31, %28, %33 : vector<32x256xi1>, vector<32x256xf32>
      %35 = arith.truncf %34 : vector<32x256xf32> to vector<32x256xbf16>
      %c0_19 = arith.constant 0 : index
      %c0_20 = arith.constant 0 : index
      %36 = vector.load %arg4[%c0_19, %c0_20] : memref<32x32xbf16, #tpu.memory_space<vmem>>, vector<32x32xbf16>
      %cst_21 = arith.constant dense<0.000000e+00> : vector<256x32xf32>
      %37 = tpu.matmul %35, %36, %cst_21 {dimension_numbers = #tpu.dot_dimension_numbers<[0], [0], [1], [1], [0, 1, 1, 1], [], []>} : vector<32x256xbf16>, vector<32x32xbf16>, vector<256x32xf32> -> vector<256x32xf32>
      %c2 = arith.constant 2 : index
      %c0_22 = arith.constant 0 : index
      %c0_23 = arith.constant 0 : index
      %38 = vector.load %arg6[%c2, %c0_22, %c0_23] : memref<3x1x32xf32, #tpu.memory_space<vmem>>, vector<1x1x32xf32>
      %39 = vector.shape_cast %38 : vector<1x1x32xf32> to vector<1x32xf32>
      %40 = vector.broadcast %39 : vector<1x32xf32> to vector<256x32xf32>
      %41 = arith.addf %37, %40 : vector<256x32xf32>
      %c2_24 = arith.constant 2 : index
      %42 = memref.load %arg1[%c2_24] : memref<3xf32, #tpu.memory_space<smem>>
      %cst_25 = arith.constant 0.000000e+00 : f32
      %43 = vector.broadcast %cst_25 : f32 to vector<256x32xf32>
      %44 = arith.cmpf ogt, %41, %43 : vector<256x32xf32>
      %45 = vector.broadcast %42 : f32 to vector<256x32xf32>
      %46 = arith.mulf %45, %41 : vector<256x32xf32>
      %47 = arith.select %44, %41, %46 : vector<256x32xi1>, vector<256x32xf32>
      %48 = arith.index_cast %4 : i32 to index
      %c0_26 = arith.constant 0 : index
      %49 = vector.load %arg7[%48, %c0_26] : memref<512x32xf32, #tpu.memory_space<vmem>>, vector<256x32xf32>
      tpu.vector_store %arg7[%48, %c0_26], %47 {strides = array<i32>} : memref<512x32xf32, #tpu.memory_space<vmem>>, vector<256x32xf32>,
    }
    %c2_i32_0 = arith.constant 2 : i32
    return
  }
  func.func @transform_0(%arg0: i32) -> i32 {
    %c0_i32 = arith.constant 0 : i32
    %c0_i32_0 = arith.constant 0 : i32
    return %c0_i32 : i32
  }
  func.func @transform_1(%arg0: i32) -> (i32, i32) {
    %c0_i32 = arith.constant 0 : i32
    %c0_i32_0 = arith.constant 0 : i32
    return %arg0, %c0_i32 : i32, i32
  }
  func.func @transform_2(%arg0: i32) -> (i32, i32, i32) {
    %c0_i32 = arith.constant 0 : i32
    %c0_i32_0 = arith.constant 0 : i32
    %c0_i32_1 = arith.constant 0 : i32
    %c0_i32_2 = arith.constant 0 : i32
    return %c0_i32, %c0_i32_0, %c0_i32_1 : i32, i32, i32
  }
  func.func @transform_3(%arg0: i32) -> (i32, i32) {
    %c0_i32 = arith.constant 0 : i32
    %c0_i32_0 = arith.constant 0 : i32
    %c0_i32_1 = arith.constant 0 : i32
    return %c0_i32, %c0_i32_0 : i32, i32
  }
  func.func @transform_4(%arg0: i32) -> (i32, i32, i32) {
    %c0_i32 = arith.constant 0 : i32
    %c0_i32_0 = arith.constant 0 : i32
    %c0_i32_1 = arith.constant 0 : i32
    %c0_i32_2 = arith.constant 0 : i32
    return %c0_i32, %c0_i32_0, %c0_i32_1 : i32, i32, i32
  }
  func.func @transform_5(%arg0: i32) -> (i32, i32, i32) {
    %c0_i32 = arith.constant 0 : i32
    %c0_i32_0 = arith.constant 0 : i32
    %c0_i32_1 = arith.constant 0 : i32
    %c0_i32_2 = arith.constant 0 : i32
    return %c0_i32, %c0_i32_0, %c0_i32_1 : i32, i32, i32
  }
  func.func @transform_6(%arg0: i32) -> (i32, i32) {
    %c0_i32 = arith.constant 0 : i32
    %c0_i32_0 = arith.constant 0 : i32
    return %arg0, %c0_i32 : i32, i32
  }
}

</mosaic_0001>

<llo_original>
// kernel: tpu_custom_call.1
$region0: #{tpu_custom_call.1}
  #allocation0 [shape = 'u32[]', space=smem, size = 0x4, offset = 0x4, fixed_abs, tag = 'smem constant byte address 0x4 - core index']
  #allocation1 [shape = 'u32[144,128]{1,0:T(1,128)}', space=vmem, size = 0x12000, scoped, tag = 'internal scratch']
  %s0 = inlined_call_operand.vmem [shape: f32[3], index: 0, kind: input, shape index: {}]
  %s1 = inlined_call_operand.vmem [shape: f32[512,32], index: 1, kind: input, shape index: {}]
  %s2 = inlined_call_operand.vmem [shape: bf16[3,32,32], index: 2, kind: input, shape index: {}]
  %s3 = inlined_call_operand.vmem [shape: bf16[32,32], index: 3, kind: input, shape index: {}]
  %s4 = inlined_call_operand.vmem [shape: f32[3,32,1], index: 4, kind: input, shape index: {}]
  %s5 = inlined_call_operand.vmem [shape: f32[3,1,32], index: 5, kind: input, shape index: {}]
  %s6 = inlined_call_operand.vmem [shape: f32[512,32], index: 6, kind: output, shape index: {}]
  %s7 = sld [smem:[#allocation0]]
  $region45: #{tpu_custom_call.1} parent=0
    _
  %s9 = ssub.s32 1, %s7
  %s10 = scalar_select 0, %s9, %s7
  $region1: #{tpu_custom_call.1} parent=0
    #allocation2 [shape = 'u8[512]{0}', space=smem, size = 0x200, scoped, tag = 'input window, operand 0, single buffered']
    #allocation3 [shape = 's32[1]{0}', space=sflag, size = 0x4, scoped, tag = 'scoped memory for tpu_custom_call.1']
    %11 = vsyncpa [#allocation3], 0
    // Predicated region
    $region2: #{tpu_custom_call.1} parent=1 // pred_check
      _
    $region3: #{tpu_custom_call.1} parent=1 // pred_check_branch
      %13 = sbr.rel (0) target = $region5
    $region4: #{tpu_custom_call.1} parent=1 // pred_region
      %s15 = ssub.s32 16, 16
      %16 = vsyncadd [#allocation3], %s15
      %s18 = sshll.u32 %s0, 4
      %s19 = int_to_ptr.vmem [resolvable:$true] %s18
      %21 = dma.vmem_to_smem %s19, 16, [#allocation2], [#allocation3]
    $region5: #{tpu_custom_call.1} parent=1 // pred_fallthru
      _
    // Predicated region
    $region6: #{tpu_custom_call.1} parent=1 // pred_check
      _
    $region7: #{tpu_custom_call.1} parent=1 // pred_check_branch
      %23 = sbr.rel (0) target = $region9
    $region8: #{tpu_custom_call.1} parent=1 // pred_region
      _
    $region9: #{tpu_custom_call.1} parent=1 // pred_fallthru
      _
    // Predicated region
    $region10: #{tpu_custom_call.1} parent=1 // pred_check
      _
    $region11: #{tpu_custom_call.1} parent=1 // pred_check_branch
      %25 = sbr.rel (0) target = $region13
    $region12: #{tpu_custom_call.1} parent=1 // pred_region
      _
    $region13: #{tpu_custom_call.1} parent=1 // pred_fallthru
      _
    // Predicated region
    $region14: #{tpu_custom_call.1} parent=1 // pred_check
      _
    $region15: #{tpu_custom_call.1} parent=1 // pred_check_branch
      %27 = sbr.rel (0) target = $region17
    $region16: #{tpu_custom_call.1} parent=1 // pred_region
      _
    $region17: #{tpu_custom_call.1} parent=1 // pred_fallthru
      _
    // Predicated region
    $region18: #{tpu_custom_call.1} parent=1 // pred_check
      _
    $region19: #{tpu_custom_call.1} parent=1 // pred_check_branch
      %29 = sbr.rel (0) target = $region21
    $region20: #{tpu_custom_call.1} parent=1 // pred_region
      _
    $region21: #{tpu_custom_call.1} parent=1 // pred_fallthru
      _
    // Predicated region
    $region22: #{tpu_custom_call.1} parent=1 // pred_check
      _
    $region23: #{tpu_custom_call.1} parent=1 // pred_check_branch
      %31 = sbr.rel (0) target = $region25
    $region24: #{tpu_custom_call.1} parent=1 // pred_region
      _
    $region25: #{tpu_custom_call.1} parent=1 // pred_fallthru
      _
    // Predicated region
    $region26: #{tpu_custom_call.1} parent=1 // pred_check
      _
    $region27: #{tpu_custom_call.1} parent=1 // pred_check_branch
      %33 = sbr.rel (0) target = $region29
    $region28: #{tpu_custom_call.1} parent=1 // pred_region
      %34 = dma.done [#allocation3], 16
    $region29: #{tpu_custom_call.1} parent=1 // pred_fallthru
      _
    %35 = sfence
    loop: start=0, step=1, limit=2
    $region30: #{tpu_custom_call.1} parent=1 // loop_pre_header
      _
    $region31: #{tpu_custom_call.1} parent=1 // loop_header
      %s38 = sphi 0, %s42
      %p39 = scmp.ge.s32.totalorder %s38, 2
    $region32: #{tpu_custom_call.1} parent=1 // loop_header_branch
      %41 = sbr.rel (%p39) target = $region36
    $region33: #{tpu_custom_call.1} parent=1 // loop_body
      %s43 = smul.u32 %s38, 256
      %s44 = scalar_lea.vmem %s1, %s43
      %v45 = vld [vmem:[%s44] sm:$0xff]
      %v46 = vld [vmem:[%s44 + $0x8] sm:$0xff]
      %v47 = vld [vmem:[%s44 + $0x10] sm:$0xff]
      %v48 = vld [vmem:[%s44 + $0x18] sm:$0xff]
      %v49 = vld [vmem:[%s44 + $0x20] sm:$0xff]
      %v50 = vld [vmem:[%s44 + $0x28] sm:$0xff]
      %v51 = vld [vmem:[%s44 + $0x30] sm:$0xff]
      %v52 = vld [vmem:[%s44 + $0x38] sm:$0xff]
      %v53 = vld [vmem:[%s44 + $0x40] sm:$0xff]
      %v54 = vld [vmem:[%s44 + $0x48] sm:$0xff]
      %v55 = vld [vmem:[%s44 + $0x50] sm:$0xff]
      %v56 = vld [vmem:[%s44 + $0x58] sm:$0xff]
      %v57 = vld [vmem:[%s44 + $0x60] sm:$0xff]
      %v58 = vld [vmem:[%s44 + $0x68] sm:$0xff]
      %v59 = vld [vmem:[%s44 + $0x70] sm:$0xff]
      %v60 = vld [vmem:[%s44 + $0x78] sm:$0xff]
      %v61 = vld [vmem:[%s44 + $0x80] sm:$0xff]
      %v62 = vld [vmem:[%s44 + $0x88] sm:$0xff]
      %v63 = vld [vmem:[%s44 + $0x90] sm:$0xff]
      %v64 = vld [vmem:[%s44 + $0x98] sm:$0xff]
      %v65 = vld [vmem:[%s44 + $0xa0] sm:$0xff]
      %v66 = vld [vmem:[%s44 + $0xa8] sm:$0xff]
      %v67 = vld [vmem:[%s44 + $0xb0] sm:$0xff]
      %v68 = vld [vmem:[%s44 + $0xb8] sm:$0xff]
      %v69 = vld [vmem:[%s44 + $0xc0] sm:$0xff]
      %v70 = vld [vmem:[%s44 + $0xc8] sm:$0xff]
      %v71 = vld [vmem:[%s44 + $0xd0] sm:$0xff]
      %v72 = vld [vmem:[%s44 + $0xd8] sm:$0xff]
      %v73 = vld [vmem:[%s44 + $0xe0] sm:$0xff]
      %v74 = vld [vmem:[%s44 + $0xe8] sm:$0xff]
      %v75 = vld [vmem:[%s44 + $0xf0] sm:$0xff]
      %v76 = vld [vmem:[%s44 + $0xf8] sm:$0xff]
      %v77 = vpack.c.bf16 %v46, %v45
      %v78 = vpack.c.bf16 %v48, %v47
      %v79 = vpack.c.bf16 %v50, %v49
      %v80 = vpack.c.bf16 %v52, %v51
      %v81 = vpack.c.bf16 %v54, %v53
      %v82 = vpack.c.bf16 %v56, %v55
      %v83 = vpack.c.bf16 %v58, %v57
      %v84 = vpack.c.bf16 %v60, %v59
      %v85 = vpack.c.bf16 %v62, %v61
      %v86 = vpack.c.bf16 %v64, %v63
      %v87 = vpack.c.bf16 %v66, %v65
      %v88 = vpack.c.bf16 %v68, %v67
      %v89 = vpack.c.bf16 %v70, %v69
      %v90 = vpack.c.bf16 %v72, %v71
      %v91 = vpack.c.bf16 %v74, %v73
      %v92 = vpack.c.bf16 %v76, %v75
      %v93 = vld [vmem:[%s2] sm:$0xf]
      %v94 = vld [vmem:[%s2 + $0x4] sm:$0xf]
      %v95 = vld [vmem:[%s2 + $0x8] sm:$0xf]
      %v96 = vld [vmem:[%s2 + $0xc] sm:$0xf]
      %v97 = vld [vmem:[%s4] sm:$0xff]
      %v98 = vld [vmem:[%s4 + $0x8] sm:$0xff]
      %v99 = vld [vmem:[%s4 + $0x10] sm:$0xff]
      %v100 = vld [vmem:[%s4 + $0x18] sm:$0xff]
      %102 = vset.pattern.permute.xlu0 0
      %103 = vperm.xlu0 %102, %v97
      %v104 = vpop.permute.xlu0 %103
      %107 = vset.pattern.permute.xlu0 0
      %108 = vperm.xlu0 %107, %v98
      %v109 = vpop.permute.xlu0 %108
      %112 = vset.pattern.permute.xlu0 0
      %113 = vperm.xlu0 %112, %v99
      %v114 = vpop.permute.xlu0 %113
      %117 = vset.pattern.permute.xlu0 0
      %118 = vperm.xlu0 %117, %v100
      %v119 = vpop.permute.xlu0 %118
      %v125 = vunpack.c.l.b16 %v93
      %v126 = vunpack.c.l.b16 %v94
      %v127 = vunpack.c.l.b16 %v95
      %v128 = vunpack.c.l.b16 %v96
      %v129 = vpack.c.b16 %v126, %v125
      %v130 = vpack.c.b16 %v128, %v127
      %vm131 = vcmask 261120
      %v133 = vsel %vm131, %v129, 0
      %v136 = vsel %vm131, %v130, 0
      %v139 = vsel %vm131, %v77, 0
      %v142 = vsel %vm131, %v78, 0
      %v145 = vsel %vm131, %v79, 0
      %v148 = vsel %vm131, %v80, 0
      %v151 = vsel %vm131, %v81, 0
      %v154 = vsel %vm131, %v82, 0
      %v157 = vsel %vm131, %v83, 0
      %v160 = vsel %vm131, %v84, 0
      %v163 = vsel %vm131, %v85, 0
      %v166 = vsel %vm131, %v86, 0
      %v169 = vsel %vm131, %v87, 0
      %v172 = vsel %vm131, %v88, 0
      %v175 = vsel %vm131, %v89, 0
      %v178 = vsel %vm131, %v90, 0
      %v181 = vsel %vm131, %v91, 0
      %v184 = vsel %vm131, %v92, 0
      %186 = vmatprep.subr.bf16.mxu0 0
      %187 = vmatpush1.bf16.xpose.msra.mxu0 %v139
      %188 = vmatprep.subr.bf16.mxu0 0
      %189 = vmatpush1.bf16.xpose.msra.mxu0 %v142
      %190 = vmatprep.subr.bf16.mxu0 0
      %191 = vmatpush1.bf16.xpose.msra.mxu0 %v145
      %192 = vmatprep.subr.bf16.mxu0 0
      %193 = vmatpush1.bf16.xpose.msra.mxu0 %v148
      %194 = vmatprep.subr.bf16.mxu0 0
      %195 = vmatpush1.bf16.xpose.msra.mxu0 %v151
      %196 = vmatprep.subr.bf16.mxu0 0
      %197 = vmatpush1.bf16.xpose.msra.mxu0 %v154
      %198 = vmatprep.subr.bf16.mxu0 0
      %199 = vmatpush1.bf16.xpose.msra.mxu0 %v157
      %200 = vmatprep.subr.bf16.mxu0 0
      %201 = vmatpush1.bf16.xpose.msra.mxu0 %v160
      %202 = vmatprep.subr.bf16.mxu0 0
      %203 = vmatpush1.bf16.xpose.msra.mxu0 %v163
      %204 = vmatprep.subr.bf16.mxu0 0
      %205 = vmatpush1.bf16.xpose.msra.mxu0 %v166
      %206 = vmatprep.subr.bf16.mxu0 0
      %207 = vmatpush1.bf16.xpose.msra.mxu0 %v169
      %208 = vmatprep.subr.bf16.mxu0 0
      %209 = vmatpush1.bf16.xpose.msra.mxu0 %v172
      %210 = vmatprep.subr.bf16.mxu0 0
      %211 = vmatpush1.bf16.xpose.msra.mxu0 %v175
      %212 = vmatprep.subr.bf16.mxu0 0
      %213 = vmatpush1.bf16.xpose.msra.mxu0 %v178
      %214 = vmatprep.subr.bf16.mxu0 0
      %215 = vmatpush1.bf16.xpose.msra.mxu0 %v181
      %216 = vmatprep.subr.bf16.mxu0 0
      %217 = vmatpush1.bf16.xpose.msra.mxu0 %v184
      %218 = vmatprep.mubr.bf16.mxu0 0
      %219 = vmatmul.mubr.bf16.gmra.mrb[0].mxu0 %v133
      %v220 = vpop.f32.mrb[0].mxu0
      %v221 = vadd.f32 %v104, %v220
      %v222 = vpop.f32.mrb[0].mxu0
      %v223 = vadd.f32 %v104, %v222
      %v224 = vpop.f32.mrb[0].mxu0
      %v225 = vadd.f32 %v109, %v224
      %v226 = vpop.f32.mrb[0].mxu0
      %v227 = vadd.f32 %v109, %v226
      %228 = vmatprep.mubr.bf16.mxu0 0
      %229 = vmatmul.mubr.bf16.gmra.mrb[0].mxu0 %v136
      %v230 = vpop.f32.mrb[0].mxu0
      %v231 = vadd.f32 %v114, %v230
      %v232 = vpop.f32.mrb[0].mxu0
      %v233 = vadd.f32 %v114, %v232
      %v234 = vpop.f32.mrb[0].mxu0
      %v235 = vadd.f32 %v119, %v234
      %v236 = vpop.f32.mrb[0].mxu0
      %v237 = vadd.f32 %v119, %v236
      %238 = vdwg.mxu0
      %s239 = sld [smem:[#allocation2]]
      %vm240 = vcmp.gt.f32.partialorder %v221, 0.0
      %vm241 = vcmp.gt.f32.partialorder %v223, 0.0
      %vm242 = vcmp.gt.f32.partialorder %v225, 0.0
      %vm243 = vcmp.gt.f32.partialorder %v227, 0.0
      %vm244 = vcmp.gt.f32.partialorder %v231, 0.0
      %vm245 = vcmp.gt.f32.partialorder %v233, 0.0
      %vm246 = vcmp.gt.f32.partialorder %v235, 0.0
      %vm247 = vcmp.gt.f32.partialorder %v237, 0.0
      %v248 = vstv %s239
      %v249 = vmul.f32 %v248, %v221
      %v250 = vmul.f32 %v248, %v223
      %v251 = vmul.f32 %v248, %v225
      %v252 = vmul.f32 %v248, %v227
      %v253 = vmul.f32 %v248, %v231
      %v254 = vmul.f32 %v248, %v233
      %v255 = vmul.f32 %v248, %v235
      %v256 = vmul.f32 %v248, %v237
      %v257 = vsel %vm240, %v221, %v249
      %v258 = vsel %vm241, %v223, %v250
      %v259 = vsel %vm242, %v225, %v251
      %v260 = vsel %vm243, %v227, %v252
      %v261 = vsel %vm244, %v231, %v253
      %v262 = vsel %vm245, %v233, %v254
      %v263 = vsel %vm246, %v235, %v255
      %v264 = vsel %vm247, %v237, %v256
      %s265 = scalar_lea.vmem %s2, 16
      %v266 = vld [vmem:[%s265] sm:$0xf]
      %v267 = vld [vmem:[%s265 + $0x4] sm:$0xf]
      %v268 = vld [vmem:[%s265 + $0x8] sm:$0xf]
      %v269 = vld [vmem:[%s265 + $0xc] sm:$0xf]
      %v270 = vpack.c.bf16 %v259, %v257
      %v271 = vpack.c.bf16 %v260, %v258
      %v272 = vpack.c.bf16 %v263, %v261
      %v273 = vpack.c.bf16 %v264, %v262
      %s274 = scalar_lea.vmem %s4, 32
      %v275 = vld [vmem:[%s274] sm:$0xff]
      %v276 = vld [vmem:[%s274 + $0x8] sm:$0xff]
      %v277 = vld [vmem:[%s274 + $0x10] sm:$0xff]
      %v278 = vld [vmem:[%s274 + $0x18] sm:$0xff]
      %280 = vset.pattern.permute.xlu0 0
      %281 = vperm.xlu0 %280, %v275
      %v282 = vpop.permute.xlu0 %281
      %285 = vset.pattern.permute.xlu0 0
      %286 = vperm.xlu0 %285, %v276
      %v287 = vpop.permute.xlu0 %286
      %290 = vset.pattern.permute.xlu0 0
      %291 = vperm.xlu0 %290, %v277
      %v292 = vpop.permute.xlu0 %291
      %295 = vset.pattern.permute.xlu0 0
      %296 = vperm.xlu0 %295, %v278
      %v297 = vpop.permute.xlu0 %296
      %v303 = vunpack.c.l.b16 %v266
      %v304 = vunpack.c.l.b16 %v267
      %v305 = vunpack.c.l.b16 %v268
      %v306 = vunpack.c.l.b16 %v269
      %v307 = vpack.c.b16 %v304, %v303
      %v308 = vpack.c.b16 %v306, %v305
      %v310 = vsel %vm131, %v307, 0
      %v313 = vsel %vm131, %v308, 0
      %315 = vmatprep.subr.bf16.mxu0 %v271
      %316 = vmatpush1.bf16.msra.mxu0 %v270
      %317 = vmatprep.subr.bf16.mxu0 %v273
      %318 = vmatpush1.bf16.msra.mxu0 %v272
      %319 = vmatprep.subr.bf16.mxu0 0
      %320 = vmatpush1.bf16.msra.mxu0 0
      %321 = vmatprep.subr.bf16.mxu0 0
      %322 = vmatpush1.bf16.msra.mxu0 0
      %323 = vmatprep.subr.bf16.mxu0 0
      %324 = vmatpush1.bf16.msra.mxu0 0
      %325 = vmatprep.subr.bf16.mxu0 0
      %326 = vmatpush1.bf16.msra.mxu0 0
      %327 = vmatprep.subr.bf16.mxu0 0
      %328 = vmatpush1.bf16.msra.mxu0 0
      %329 = vmatprep.subr.bf16.mxu0 0
      %330 = vmatpush1.bf16.msra.mxu0 0
      %331 = vmatprep.subr.bf16.mxu0 0
      %332 = vmatpush1.bf16.msra.mxu0 0
      %333 = vmatprep.subr.bf16.mxu0 0
      %334 = vmatpush1.bf16.msra.mxu0 0
      %335 = vmatprep.subr.bf16.mxu0 0
      %336 = vmatpush1.bf16.msra.mxu0 0
      %337 = vmatprep.subr.bf16.mxu0 0
      %338 = vmatpush1.bf16.msra.mxu0 0
      %339 = vmatprep.subr.bf16.mxu0 0
      %340 = vmatpush1.bf16.msra.mxu0 0
      %341 = vmatprep.subr.bf16.mxu0 0
      %342 = vmatpush1.bf16.msra.mxu0 0
      %343 = vmatprep.subr.bf16.mxu0 0
      %344 = vmatpush1.bf16.msra.mxu0 0
      %345 = vmatprep.subr.bf16.mxu0 0
      %346 = vmatpush1.bf16.msra.mxu0 0
      %347 = vmatprep.mubr.bf16.mxu0 0
      %348 = vmatmul.mubr.bf16.gmra.mrb[0].mxu0 %v310
      %v349 = vpop.f32.mrb[0].mxu0
      %v350 = vadd.f32 %v282, %v349
      %v351 = vpop.f32.mrb[0].mxu0
      %v352 = vadd.f32 %v282, %v351
      %v353 = vpop.f32.mrb[0].mxu0
      %v354 = vadd.f32 %v287, %v353
      %v355 = vpop.f32.mrb[0].mxu0
      %v356 = vadd.f32 %v287, %v355
      %357 = vmatprep.mubr.bf16.mxu0 0
      %358 = vmatmul.mubr.bf16.gmra.mrb[0].mxu0 %v313
      %v359 = vpop.f32.mrb[0].mxu0
      %v360 = vadd.f32 %v292, %v359
      %v361 = vpop.f32.mrb[0].mxu0
      %v362 = vadd.f32 %v292, %v361
      %v363 = vpop.f32.mrb[0].mxu0
      %v364 = vadd.f32 %v297, %v363
      %v365 = vpop.f32.mrb[0].mxu0
      %v366 = vadd.f32 %v297, %v365
      %367 = vdwg.mxu0
      %s368 = sld [smem:[#allocation2 + $0x1]]
      %vm369 = vcmp.gt.f32.partialorder %v350, 0.0
      %vm370 = vcmp.gt.f32.partialorder %v352, 0.0
      %vm371 = vcmp.gt.f32.partialorder %v354, 0.0
      %vm372 = vcmp.gt.f32.partialorder %v356, 0.0
      %vm373 = vcmp.gt.f32.partialorder %v360, 0.0
      %vm374 = vcmp.gt.f32.partialorder %v362, 0.0
      %vm375 = vcmp.gt.f32.partialorder %v364, 0.0
      %vm376 = vcmp.gt.f32.partialorder %v366, 0.0
      %v377 = vstv %s368
      %v378 = vmul.f32 %v377, %v350
      %v379 = vmul.f32 %v377, %v352
      %v380 = vmul.f32 %v377, %v354
      %v381 = vmul.f32 %v377, %v356
      %v382 = vmul.f32 %v377, %v360
      %v383 = vmul.f32 %v377, %v362
      %v384 = vmul.f32 %v377, %v364
      %v385 = vmul.f32 %v377, %v366
      %v386 = vsel %vm369, %v350, %v378
      %v387 = vsel %vm370, %v352, %v379
      %v388 = vsel %vm371, %v354, %v380
      %v389 = vsel %vm372, %v356, %v381
      %v390 = vsel %vm373, %v360, %v382
      %v391 = vsel %vm374, %v362, %v383
      %v392 = vsel %vm375, %v364, %v384
      %v393 = vsel %vm376, %v366, %v385
      %v394 = vpack.c.bf16 %v388, %v386
      %v395 = vpack.c.bf16 %v389, %v387
      %v396 = vpack.c.bf16 %v392, %v390
      %v397 = vpack.c.bf16 %v393, %v391
      %v398 = vld [vmem:[%s3] sm:$0xf]
      %v399 = vld [vmem:[%s3 + $0x4] sm:$0xf]
      %v400 = vld [vmem:[%s3 + $0x8] sm:$0xf]
      %v401 = vld [vmem:[%s3 + $0xc] sm:$0xf]
      %s402 = scalar_lea.vmem %s5, 2
      %v403 = vld [vmem:[%s402] sm:$0x1]
      %v405 = vlaneseq
      %v406 = vshrl.u32 %v405, 7
      %v407 = vsub.s32 0, %v406
      %v408 = vrot.slane %v403, %v407
      %410 = vxpose.xlu0.c.b16.start [1/8] %v394, 128
      %411 = vxpose.xlu0.c.b16.cont [2/8] %v396, 128
      %412 = vxpose.xlu0.c.b16.cont [3/8] 0, 128
      %413 = vxpose.xlu0.c.b16.cont [4/8] 0, 128
      %414 = vxpose.xlu0.c.b16.cont [5/8] 0, 128
      %415 = vxpose.xlu0.c.b16.cont [6/8] 0, 128
      %416 = vxpose.xlu0.c.b16.cont [7/8] 0, 128
      %417 = vxpose.xlu0.c.b16.end [8/8] 0, 128
      %v418 = vpop.trf.xlu0
      %v419 = vpop.trf.xlu0
      %v420 = vpop.trf.xlu0
      %v421 = vpop.trf.xlu0
      %v422 = vpop.trf.xlu0
      %v423 = vpop.trf.xlu0
      %v424 = vpop.trf.xlu0
      %v425 = vpop.trf.xlu0
      %426 = vxpose.xlu0.c.b16.start [1/8] %v395, 128
      %427 = vxpose.xlu0.c.b16.cont [2/8] %v397, 128
      %428 = vxpose.xlu0.c.b16.cont [3/8] 0, 128
      %429 = vxpose.xlu0.c.b16.cont [4/8] 0, 128
      %430 = vxpose.xlu0.c.b16.cont [5/8] 0, 128
      %431 = vxpose.xlu0.c.b16.cont [6/8] 0, 128
      %432 = vxpose.xlu0.c.b16.cont [7/8] 0, 128
      %433 = vxpose.xlu0.c.b16.end [8/8] 0, 128
      %v434 = vpop.trf.xlu0
      %v435 = vpop.trf.xlu0
      %v436 = vpop.trf.xlu0
      %v437 = vpop.trf.xlu0
      %v438 = vpop.trf.xlu0
      %v439 = vpop.trf.xlu0
      %v440 = vpop.trf.xlu0
      %v441 = vpop.trf.xlu0
      %v446 = vunpack.c.l.b16 %v398
      %v447 = vunpack.c.l.b16 %v399
      %v448 = vunpack.c.l.b16 %v400
      %v449 = vunpack.c.l.b16 %v401
      %v450 = vpack.c.b16 %v447, %v446
      %v451 = vpack.c.b16 %v449, %v448
      %v455 = vsel %vm131, %v418, 0
      %v458 = vsel %vm131, %v419, 0
      %v461 = vsel %vm131, %v420, 0
      %v464 = vsel %vm131, %v421, 0
      %v467 = vsel %vm131, %v422, 0
      %v470 = vsel %vm131, %v423, 0
      %v473 = vsel %vm131, %v424, 0
      %v476 = vsel %vm131, %v425, 0
      %v479 = vsel %vm131, %v434, 0
      %v482 = vsel %vm131, %v435, 0
      %v485 = vsel %vm131, %v436, 0
      %v488 = vsel %vm131, %v437, 0
      %v491 = vsel %vm131, %v438, 0
      %v494 = vsel %vm131, %v439, 0
      %v497 = vsel %vm131, %v440, 0
      %v500 = vsel %vm131, %v441, 0
      %502 = vmatprep.subr.bf16.mxu0 0
      %503 = vmatpush1.bf16.msra.mxu0 %v450
      %504 = vmatprep.subr.bf16.mxu0 0
      %505 = vmatpush1.bf16.msra.mxu0 %v451
      %506 = vmatprep.subr.bf16.mxu0 0
      %507 = vmatpush1.bf16.msra.mxu0 0
      %508 = vmatprep.subr.bf16.mxu0 0
      %509 = vmatpush1.bf16.msra.mxu0 0
      %510 = vmatprep.subr.bf16.mxu0 0
      %511 = vmatpush1.bf16.msra.mxu0 0
      %512 = vmatprep.subr.bf16.mxu0 0
      %513 = vmatpush1.bf16.msra.mxu0 0
      %514 = vmatprep.subr.bf16.mxu0 0
      %515 = vmatpush1.bf16.msra.mxu0 0
      %516 = vmatprep.subr.bf16.mxu0 0
      %517 = vmatpush1.bf16.msra.mxu0 0
      %518 = vmatprep.subr.bf16.mxu0 0
      %519 = vmatpush1.bf16.msra.mxu0 0
      %520 = vmatprep.subr.bf16.mxu0 0
      %521 = vmatpush1.bf16.msra.mxu0 0
      %522 = vmatprep.subr.bf16.mxu0 0
      %523 = vmatpush1.bf16.msra.mxu0 0
      %524 = vmatprep.subr.bf16.mxu0 0
      %525 = vmatpush1.bf16.msra.mxu0 0
      %526 = vmatprep.subr.bf16.mxu0 0
      %527 = vmatpush1.bf16.msra.mxu0 0
      %528 = vmatprep.subr.bf16.mxu0 0
      %529 = vmatpush1.bf16.msra.mxu0 0
      %530 = vmatprep.subr.bf16.mxu0 0
      %531 = vmatpush1.bf16.msra.mxu0 0
      %532 = vmatprep.subr.bf16.mxu0 0
      %533 = vmatpush1.bf16.msra.mxu0 0
      %534 = vmatprep.mubr.bf16.mxu0 0
      %535 = vmatmul.mubr.bf16.gmra.mrb[0].mxu0 %v455
      %v536 = vpop.f32.mrb[0].mxu0
      %v537 = vadd.f32 %v408, %v536
      %v538 = vpop.f32.mrb[0].mxu0
      %v539 = vpop.f32.mrb[0].mxu0
      %v540 = vadd.f32 %v408, %v539
      %v541 = vpop.f32.mrb[0].mxu0
      %542 = vmatprep.mubr.bf16.mxu0 0
      %543 = vmatmul.mubr.bf16.gmra.mrb[0].mxu0 %v458
      %v544 = vpop.f32.mrb[0].mxu0
      %v545 = vadd.f32 %v408, %v544
      %v546 = vpop.f32.mrb[0].mxu0
      %v547 = vpop.f32.mrb[0].mxu0
      %v548 = vadd.f32 %v408, %v547
      %v549 = vpop.f32.mrb[0].mxu0
      %550 = vmatprep.mubr.bf16.mxu0 0
      %551 = vmatmul.mubr.bf16.gmra.mrb[0].mxu0 %v461
      %v552 = vpop.f32.mrb[0].mxu0
      %v553 = vadd.f32 %v408, %v552
      %v554 = vpop.f32.mrb[0].mxu0
      %v555 = vpop.f32.mrb[0].mxu0
      %v556 = vadd.f32 %v408, %v555
      %v557 = vpop.f32.mrb[0].mxu0
      %558 = vmatprep.mubr.bf16.mxu0 0
      %559 = vmatmul.mubr.bf16.gmra.mrb[0].mxu0 %v464
      %v560 = vpop.f32.mrb[0].mxu0
      %v561 = vadd.f32 %v408, %v560
      %v562 = vpop.f32.mrb[0].mxu0
      %v563 = vpop.f32.mrb[0].mxu0
      %v564 = vadd.f32 %v408, %v563
      %v565 = vpop.f32.mrb[0].mxu0
      %566 = vmatprep.mubr.bf16.mxu0 0
      %567 = vmatmul.mubr.bf16.gmra.mrb[0].mxu0 %v467
      %v568 = vpop.f32.mrb[0].mxu0
      %v569 = vadd.f32 %v408, %v568
      %v570 = vpop.f32.mrb[0].mxu0
      %v571 = vpop.f32.mrb[0].mxu0
      %v572 = vadd.f32 %v408, %v571
      %v573 = vpop.f32.mrb[0].mxu0
      %574 = vmatprep.mubr.bf16.mxu0 0
      %575 = vmatmul.mubr.bf16.gmra.mrb[0].mxu0 %v470
      %v576 = vpop.f32.mrb[0].mxu0
      %v577 = vadd.f32 %v408, %v576
      %v578 = vpop.f32.mrb[0].mxu0
      %v579 = vpop.f32.mrb[0].mxu0
      %v580 = vadd.f32 %v408, %v579
      %v581 = vpop.f32.mrb[0].mxu0
      %582 = vmatprep.mubr.bf16.mxu0 0
      %583 = vmatmul.mubr.bf16.gmra.mrb[0].mxu0 %v473
      %v584 = vpop.f32.mrb[0].mxu0
      %v585 = vadd.f32 %v408, %v584
      %v586 = vpop.f32.mrb[0].mxu0
      %v587 = vpop.f32.mrb[0].mxu0
      %v588 = vadd.f32 %v408, %v587
      %v589 = vpop.f32.mrb[0].mxu0
      %590 = vmatprep.mubr.bf16.mxu0 0
      %591 = vmatmul.mubr.bf16.gmra.mrb[0].mxu0 %v476
      %v592 = vpop.f32.mrb[0].mxu0
      %v593 = vadd.f32 %v408, %v592
      %v594 = vpop.f32.mrb[0].mxu0
      %v595 = vpop.f32.mrb[0].mxu0
      %v596 = vadd.f32 %v408, %v595
      %v597 = vpop.f32.mrb[0].mxu0
      %598 = vmatprep.mubr.bf16.mxu0 0
      %599 = vmatmul.mubr.bf16.gmra.mrb[0].mxu0 %v479
      %v600 = vpop.f32.mrb[0].mxu0
      %v601 = vadd.f32 %v408, %v600
      %v602 = vpop.f32.mrb[0].mxu0
      %v603 = vpop.f32.mrb[0].mxu0
      %v604 = vadd.f32 %v408, %v603
      %v605 = vpop.f32.mrb[0].mxu0
      %606 = vmatprep.mubr.bf16.mxu0 0
      %607 = vmatmul.mubr.bf16.gmra.mrb[0].mxu0 %v482
      %v608 = vpop.f32.mrb[0].mxu0
      %v609 = vadd.f32 %v408, %v608
      %v610 = vpop.f32.mrb[0].mxu0
      %v611 = vpop.f32.mrb[0].mxu0
      %v612 = vadd.f32 %v408, %v611
      %v613 = vpop.f32.mrb[0].mxu0
      %614 = vmatprep.mubr.bf16.mxu0 0
      %615 = vmatmul.mubr.bf16.gmra.mrb[0].mxu0 %v485
      %v616 = vpop.f32.mrb[0].mxu0
      %v617 = vadd.f32 %v408, %v616
      %v618 = vpop.f32.mrb[0].mxu0
      %v619 = vpop.f32.mrb[0].mxu0
      %v620 = vadd.f32 %v408, %v619
      %v621 = vpop.f32.mrb[0].mxu0
      %622 = vmatprep.mubr.bf16.mxu0 0
      %623 = vmatmul.mubr.bf16.gmra.mrb[0].mxu0 %v488
      %v624 = vpop.f32.mrb[0].mxu0
      %v625 = vadd.f32 %v408, %v624
      %v626 = vpop.f32.mrb[0].mxu0
      %v627 = vpop.f32.mrb[0].mxu0
      %v628 = vadd.f32 %v408, %v627
      %v629 = vpop.f32.mrb[0].mxu0
      %630 = vmatprep.mubr.bf16.mxu0 0
      %631 = vmatmul.mubr.bf16.gmra.mrb[0].mxu0 %v491
      %v632 = vpop.f32.mrb[0].mxu0
      %v633 = vadd.f32 %v408, %v632
      %v634 = vpop.f32.mrb[0].mxu0
      %v635 = vpop.f32.mrb[0].mxu0
      %v636 = vadd.f32 %v408, %v635
      %v637 = vpop.f32.mrb[0].mxu0
      %638 = vmatprep.mubr.bf16.mxu0 0
      %639 = vmatmul.mubr.bf16.gmra.mrb[0].mxu0 %v494
      %v640 = vpop.f32.mrb[0].mxu0
      %v641 = vadd.f32 %v408, %v640
      %v642 = vpop.f32.mrb[0].mxu0
      %v643 = vpop.f32.mrb[0].mxu0
      %v644 = vadd.f32 %v408, %v643
      %v645 = vpop.f32.mrb[0].mxu0
      %646 = vmatprep.mubr.bf16.mxu0 0
      %647 = vmatmul.mubr.bf16.gmra.mrb[0].mxu0 %v497
      %v648 = vpop.f32.mrb[0].mxu0
      %v649 = vadd.f32 %v408, %v648
      %v650 = vpop.f32.mrb[0].mxu0
      %v651 = vpop.f32.mrb[0].mxu0
      %v652 = vadd.f32 %v408, %v651
      %v653 = vpop.f32.mrb[0].mxu0
      %654 = vmatprep.mubr.bf16.mxu0 0
      %655 = vmatmul.mubr.bf16.gmra.mrb[0].mxu0 %v500
      %v656 = vpop.f32.mrb[0].mxu0
      %v657 = vadd.f32 %v408, %v656
      %v658 = vpop.f32.mrb[0].mxu0
      %v659 = vpop.f32.mrb[0].mxu0
      %v660 = vadd.f32 %v408, %v659
      %v661 = vpop.f32.mrb[0].mxu0
      %662 = vdwg.mxu0
      %s663 = sld [smem:[#allocation2 + $0x2]]
      %vm664 = vcmp.gt.f32.partialorder %v537, 0.0
      %vm665 = vcmp.gt.f32.partialorder %v540, 0.0
      %vm666 = vcmp.gt.f32.partialorder %v545, 0.0
      %vm667 = vcmp.gt.f32.partialorder %v548, 0.0
      %vm668 = vcmp.gt.f32.partialorder %v553, 0.0
      %vm669 = vcmp.gt.f32.partialorder %v556, 0.0
      %vm670 = vcmp.gt.f32.partialorder %v561, 0.0
      %vm671 = vcmp.gt.f32.partialorder %v564, 0.0
      %vm672 = vcmp.gt.f32.partialorder %v569, 0.0
      %vm673 = vcmp.gt.f32.partialorder %v572, 0.0
      %vm674 = vcmp.gt.f32.partialorder %v577, 0.0
      %vm675 = vcmp.gt.f32.partialorder %v580, 0.0
      %vm676 = vcmp.gt.f32.partialorder %v585, 0.0
      %vm677 = vcmp.gt.f32.partialorder %v588, 0.0
      %vm678 = vcmp.gt.f32.partialorder %v593, 0.0
      %vm679 = vcmp.gt.f32.partialorder %v596, 0.0
      %vm680 = vcmp.gt.f32.partialorder %v601, 0.0
      %vm681 = vcmp.gt.f32.partialorder %v604, 0.0
      %vm682 = vcmp.gt.f32.partialorder %v609, 0.0
      %vm683 = vcmp.gt.f32.partialorder %v612, 0.0
      %vm684 = vcmp.gt.f32.partialorder %v617, 0.0
      %vm685 = vcmp.gt.f32.partialorder %v620, 0.0
      %vm686 = vcmp.gt.f32.partialorder %v625, 0.0
      %vm687 = vcmp.gt.f32.partialorder %v628, 0.0
      %vm688 = vcmp.gt.f32.partialorder %v633, 0.0
      %vm689 = vcmp.gt.f32.partialorder %v636, 0.0
      %vm690 = vcmp.gt.f32.partialorder %v641, 0.0
      %vm691 = vcmp.gt.f32.partialorder %v644, 0.0
      %vm692 = vcmp.gt.f32.partialorder %v649, 0.0
      %vm693 = vcmp.gt.f32.partialorder %v652, 0.0
      %vm694 = vcmp.gt.f32.partialorder %v657, 0.0
      %vm695 = vcmp.gt.f32.partialorder %v660, 0.0
      %v696 = vstv %s663
      %v697 = vmul.f32 %v696, %v537
      %v698 = vmul.f32 %v696, %v540
      %v699 = vmul.f32 %v696, %v545
      %v700 = vmul.f32 %v696, %v548
      %v701 = vmul.f32 %v696, %v553
      %v702 = vmul.f32 %v696, %v556
      %v703 = vmul.f32 %v696, %v561
      %v704 = vmul.f32 %v696, %v564
      %v705 = vmul.f32 %v696, %v569
      %v706 = vmul.f32 %v696, %v572
      %v707 = vmul.f32 %v696, %v577
      %v708 = vmul.f32 %v696, %v580
      %v709 = vmul.f32 %v696, %v585
      %v710 = vmul.f32 %v696, %v588
      %v711 = vmul.f32 %v696, %v593
      %v712 = vmul.f32 %v696, %v596
      %v713 = vmul.f32 %v696, %v601
      %v714 = vmul.f32 %v696, %v604
      %v715 = vmul.f32 %v696, %v609
      %v716 = vmul.f32 %v696, %v612
      %v717 = vmul.f32 %v696, %v617
      %v718 = vmul.f32 %v696, %v620
      %v719 = vmul.f32 %v696, %v625
      %v720 = vmul.f32 %v696, %v628
      %v721 = vmul.f32 %v696, %v633
      %v722 = vmul.f32 %v696, %v636
      %v723 = vmul.f32 %v696, %v641
      %v724 = vmul.f32 %v696, %v644
      %v725 = vmul.f32 %v696, %v649
      %v726 = vmul.f32 %v696, %v652
      %v727 = vmul.f32 %v696, %v657
      %v728 = vmul.f32 %v696, %v660
      %v729 = vsel %vm664, %v537, %v697
      %v730 = vsel %vm665, %v540, %v698
      %v731 = vsel %vm666, %v545, %v699
      %v732 = vsel %vm667, %v548, %v700
      %v733 = vsel %vm668, %v553, %v701
      %v734 = vsel %vm669, %v556, %v702
      %v735 = vsel %vm670, %v561, %v703
      %v736 = vsel %vm671, %v564, %v704
      %v737 = vsel %vm672, %v569, %v705
      %v738 = vsel %vm673, %v572, %v706
      %v739 = vsel %vm674, %v577, %v707
      %v740 = vsel %vm675, %v580, %v708
      %v741 = vsel %vm676, %v585, %v709
      %v742 = vsel %vm677, %v588, %v710
      %v743 = vsel %vm678, %v593, %v711
      %v744 = vsel %vm679, %v596, %v712
      %v745 = vsel %vm680, %v601, %v713
      %v746 = vsel %vm681, %v604, %v714
      %v747 = vsel %vm682, %v609, %v715
      %v748 = vsel %vm683, %v612, %v716
      %v749 = vsel %vm684, %v617, %v717
      %v750 = vsel %vm685, %v620, %v718
      %v751 = vsel %vm686, %v625, %v719
      %v752 = vsel %vm687, %v628, %v720
      %v753 = vsel %vm688, %v633, %v721
      %v754 = vsel %vm689, %v636, %v722
      %v755 = vsel %vm690, %v641, %v723
      %v756 = vsel %vm691, %v644, %v724
      %v757 = vsel %vm692, %v649, %v725
      %v758 = vsel %vm693, %v652, %v726
      %v759 = vsel %vm694, %v657, %v727
      %v760 = vsel %vm695, %v660, %v728
      %s761 = scalar_lea.vmem %s6, %s43
      %762 = vst.msk [vmem:[%s761] sm:$0xff] %vm131, %v729
      %763 = vst.msk [vmem:[%s761 + $0x8] sm:$0xff] %vm131, %v730
      %764 = vst.msk [vmem:[%s761 + $0x10] sm:$0xff] %vm131, %v731
      %765 = vst.msk [vmem:[%s761 + $0x18] sm:$0xff] %vm131, %v732
      %766 = vst.msk [vmem:[%s761 + $0x20] sm:$0xff] %vm131, %v733
      %767 = vst.msk [vmem:[%s761 + $0x28] sm:$0xff] %vm131, %v734
      %768 = vst.msk [vmem:[%s761 + $0x30] sm:$0xff] %vm131, %v735
      %769 = vst.msk [vmem:[%s761 + $0x38] sm:$0xff] %vm131, %v736
      %770 = vst.msk [vmem:[%s761 + $0x40] sm:$0xff] %vm131, %v737
      %771 = vst.msk [vmem:[%s761 + $0x48] sm:$0xff] %vm131, %v738
      %772 = vst.msk [vmem:[%s761 + $0x50] sm:$0xff] %vm131, %v739
      %773 = vst.msk [vmem:[%s761 + $0x58] sm:$0xff] %vm131, %v740
      %774 = vst.msk [vmem:[%s761 + $0x60] sm:$0xff] %vm131, %v741
      %775 = vst.msk [vmem:[%s761 + $0x68] sm:$0xff] %vm131, %v742
      %776 = vst.msk [vmem:[%s761 + $0x70] sm:$0xff] %vm131, %v743
      %777 = vst.msk [vmem:[%s761 + $0x78] sm:$0xff] %vm131, %v744
      %778 = vst.msk [vmem:[%s761 + $0x80] sm:$0xff] %vm131, %v745
      %779 = vst.msk [vmem:[%s761 + $0x88] sm:$0xff] %vm131, %v746
      %780 = vst.msk [vmem:[%s761 + $0x90] sm:$0xff] %vm131, %v747
      %781 = vst.msk [vmem:[%s761 + $0x98] sm:$0xff] %vm131, %v748
      %782 = vst.msk [vmem:[%s761 + $0xa0] sm:$0xff] %vm131, %v749
      %783 = vst.msk [vmem:[%s761 + $0xa8] sm:$0xff] %vm131, %v750
      %784 = vst.msk [vmem:[%s761 + $0xb0] sm:$0xff] %vm131, %v751
      %785 = vst.msk [vmem:[%s761 + $0xb8] sm:$0xff] %vm131, %v752
      %786 = vst.msk [vmem:[%s761 + $0xc0] sm:$0xff] %vm131, %v753
      %787 = vst.msk [vmem:[%s761 + $0xc8] sm:$0xff] %vm131, %v754
      %788 = vst.msk [vmem:[%s761 + $0xd0] sm:$0xff] %vm131, %v755
      %789 = vst.msk [vmem:[%s761 + $0xd8] sm:$0xff] %vm131, %v756
      %790 = vst.msk [vmem:[%s761 + $0xe0] sm:$0xff] %vm131, %v757
      %791 = vst.msk [vmem:[%s761 + $0xe8] sm:$0xff] %vm131, %v758
      %792 = vst.msk [vmem:[%s761 + $0xf0] sm:$0xff] %vm131, %v759
      %793 = vst.msk [vmem:[%s761 + $0xf8] sm:$0xff] %vm131, %v760
    $region34: #{tpu_custom_call.1} parent=1 // loop_footer
      %s42 = sadd.s32 1, %s38
    $region35: #{tpu_custom_call.1} parent=1 // loop_footer_branch
      %37 = sbr.rel target = $region31
    $region36: #{tpu_custom_call.1} parent=1 // loop_exit
      _
    // Predicated region
    $region37: #{tpu_custom_call.1} parent=1 // pred_check
      _
    $region38: #{tpu_custom_call.1} parent=1 // pred_check_branch
      %795 = sbr.rel (0) target = $region40
    $region39: #{tpu_custom_call.1} parent=1 // pred_region
      _
    $region40: #{tpu_custom_call.1} parent=1 // pred_fallthru
      _
    // Predicated region
    $region41: #{tpu_custom_call.1} parent=1 // pred_check
      _
    $region42: #{tpu_custom_call.1} parent=1 // pred_check_branch
      %797 = sbr.rel (0) target = $region44
    $region43: #{tpu_custom_call.1} parent=1 // pred_region
      _
    $region44: #{tpu_custom_call.1} parent=1 // pred_fallthru
      _
    %798 = vsyncpa [#allocation3], 1

</llo_original>
